<compile_context>
chip_gen: v7x
topology: tpu7x:2x2x1
jax: 0.10.0
libtpu: 0.0.40
codegen_flags: <defaults>
</compile_context>

<pallas_src>
import jax
import jax.numpy as jnp
from jax.experimental import pallas as pl
from jax.experimental.pallas import tpu as pltpu

KSIZE = 3  # kernel_size=3, padding=1, stride=1 (as in the PyTorch module)


def _round_up(x, m):
    return ((x + m - 1) // m) * m


def convlstm_kernel(p_ref, w_ref, b_ref, c_ref, hid_ref, cell_ref):
    """
    p_ref:    (KKCp, tile_n)   bf16 channel-major im2col patches (K on sublanes)
    w_ref:    (4*Hcp, KKCp)    bf16 gate weights, rows = [i | f | o | g]
    b_ref:    (4*Hcp, 1)       f32  gate biases
    c_ref:    (Hcp, tile_n)    f32  previous cell state (channel-major)
    hid_ref:  (Hcp, tile_n)    bf16 output hidden state (channel-major)
    cell_ref: (Hcp, tile_n)    f32  output cell state   (channel-major)
    """
    hc = c_ref.shape[0]

    # One fused matmul for all four gates: bf16 MXU, f32 accumulation.
    pre = jnp.dot(w_ref[...], p_ref[...], preferred_element_type=jnp.float32)
    pre = pre + b_ref[...]                      # lane-broadcast of (4*Hcp, 1)

    def sig(x):
        # sigmoid(x) = 0.5*tanh(0.5*x) + 0.5 : rides the EUP slot, no VPU divide.
        return 0.5 * jnp.tanh(0.5 * x) + 0.5

    # Gate split = static sublane slices (Hcp is a multiple of 8).
    in_gate = sig(pre[:hc])
    remember_gate = sig(pre[hc:2 * hc])
    out_gate = sig(pre[2 * hc:3 * hc])
    cell_gate = jnp.tanh(pre[3 * hc:4 * hc])

    cell = remember_gate * c_ref[...] + in_gate * cell_gate
    cell_ref[...] = cell
    hid_ref[...] = (out_gate * jnp.tanh(cell)).astype(hid_ref.dtype)


def conv_lstm_cell(x_nchw, h_nchw, c_nchw, w_oihw, bias, hid_ch, *, tile_n=2048):
    """Pallas-backed ConvLSTMCell.forward.  Inputs/outputs are NCHW like PyTorch."""
    B, in_ch, H, W = x_nchw.shape
    C = in_ch + hid_ch
    KKC = KSIZE * KSIZE * C
    KKCp = _round_up(KKC, 16)        # clean bf16 sublane packing on the K axis
    Hcp = _round_up(hid_ch, 8)       # gate rows aligned to sublane-8 boundaries
    N = B * H * W

    # --- tile / grid sizing -------------------------------------------------
    tile_n = max(128, (int(tile_n) // 128) * 128)
    n_pad128 = _round_up(N, 128)
    # Keep >= 2 grid steps when the problem allows it (v7x has 2 TensorCores;
    # "parallel" sharding of the grid needs at least 2 steps).
    if n_pad128 >= 256:
        tile_n = min(tile_n, _round_up(pl.cdiv(N, 2), 128))
    tile_n = min(tile_n, n_pad128)
    Np = pl.cdiv(N, tile_n) * tile_n

    # --- wrapper glue (plain JAX): cast early, channel-major, im2col ---------
    # TODO(synk): for a recurrent loop over T steps, hoist the weight/bias
    # reshapes and keep h/c in the channel-major (Hc, N) layout between steps
    # (alias prev_c -> cell via input_output_aliases); only unpack at sequence
    # boundaries.
    stacked = jnp.concatenate(
        [x_nchw.astype(jnp.bfloat16), h_nchw.astype(jnp.bfloat16)], axis=1)
    stacked = jnp.transpose(stacked, (1, 0, 2, 3))               # (C, B, H, W)
    xpad = jnp.pad(stacked, ((0, 0), (0, 0), (1, 1), (1, 1)))    # (C, B, H+2, W+2)
    # TODO(synk): this im2col still inflates the input HBM stream ~9x; a
    # halo-block kernel DMA-ing (tile_h+2) padded rows per step and doing the
    # 9 taps in VMEM would remove it.
    patches_t = jnp.concatenate(
        [xpad[:, :, ky:ky + H, kx:kx + W]
         for ky in range(KSIZE) for kx in range(KSIZE)],
        axis=0,
    ).reshape(KKC, N)                      # row index = (ky, kx, c), channel-major

    prev_c_t = jnp.transpose(c_nchw, (1, 0, 2, 3)).reshape(hid_ch, N)
    prev_c_t = prev_c_t.astype(jnp.float32)

    patches_t = jnp.pad(patches_t, ((0, KKCp - KKC), (0, Np - N)))
    prev_c_t = jnp.pad(prev_c_t, ((0, Hcp - hid_ch), (0, Np - N)))

    # PyTorch conv weight (4*Hc, C, 3, 3); gate order (i, f, o, g) via chunk(4,1).
    w = jnp.transpose(w_oihw, (0, 2, 3, 1)).reshape(4, hid_ch, KKC)  # (ky,kx,c)
    w = jnp.pad(w, ((0, 0), (0, Hcp - hid_ch), (0, KKCp - KKC)))
    w_mat = w.reshape(4 * Hcp, KKCp).astype(jnp.bfloat16)
    b = jnp.pad(bias.reshape(4, hid_ch), ((0, 0), (0, Hcp - hid_ch)))
    b_mat = b.reshape(4 * Hcp, 1).astype(jnp.float32)

    cost = pl.CostEstimate(
        flops=2 * Np * KKCp * 4 * Hcp,             # MACs actually issued to the MXU
        transcendentals=5 * Np * Hcp,
        bytes_accessed=(KKCp * Np * 2              # patches (bf16)
                        + 4 * Hcp * KKCp * 2       # weights (bf16)
                        + 4 * Hcp * 4              # bias (f32)
                        + Hcp * Np * 4             # prev_c read (f32)
                        + Hcp * Np * (2 + 4)),     # hidden (bf16) + cell (f32) writes
    )

    hid_t, cell_t = pl.pallas_call(
        convlstm_kernel,
        grid=(Np // tile_n,),
        in_specs=[
            pl.BlockSpec((KKCp, tile_n), lambda i: (0, i)),
            pl.BlockSpec((4 * Hcp, KKCp), lambda i: (0, 0)),   # resident weights
            pl.BlockSpec((4 * Hcp, 1), lambda i: (0, 0)),      # resident bias
            pl.BlockSpec((Hcp, tile_n), lambda i: (0, i)),
        ],
        out_specs=(
            pl.BlockSpec((Hcp, tile_n), lambda i: (0, i)),
            pl.BlockSpec((Hcp, tile_n), lambda i: (0, i)),
        ),
        out_shape=(
            jax.ShapeDtypeStruct((Hcp, Np), jnp.bfloat16),     # hidden (bf16 store)
            jax.ShapeDtypeStruct((Hcp, Np), jnp.float32),      # cell   (f32 store)
        ),
        compiler_params=pltpu.CompilerParams(
            dimension_semantics=("parallel",),
        ),
        cost_estimate=cost,
    )(patches_t, w_mat, b_mat, prev_c_t)

    hid = hid_t[:hid_ch, :N].astype(jnp.float32).reshape(hid_ch, B, H, W)
    cel = cell_t[:hid_ch, :N].reshape(hid_ch, B, H, W)
    hidden = jnp.transpose(hid, (1, 0, 2, 3))
    cell = jnp.transpose(cel, (1, 0, 2, 3))
    return hidden, cell


def reference_conv_lstm_cell(x, h, c, w_oihw, bias, hid_ch):
    """Pure-JAX reference mirroring the PyTorch module (NCHW conv)."""
    stacked = jnp.concatenate([x, h], axis=1)
    gates = jax.lax.conv_general_dilated(
        stacked, w_oihw,
        window_strides=(1, 1), padding=((1, 1), (1, 1)),
        dimension_numbers=("NCHW", "OIHW", "NCHW"),
    ) + bias[None, :, None, None]
    i_g, f_g, o_g, g_g = jnp.split(gates, 4, axis=1)
    i_g = jax.nn.sigmoid(i_g)
    f_g = jax.nn.sigmoid(f_g)
    o_g = jax.nn.sigmoid(o_g)
    g_g = jnp.tanh(g_g)
    cell = f_g * c + i_g * g_g
    hidden = o_g * jnp.tanh(cell)
    return hidden, cell


if __name__ == "__main__":
    # Small, deterministic setup: batch=2, in_ch=4, hid_ch=8, spatial 16x16.
    B, in_ch, hid_ch, H, W = 2, 4, 8, 16, 16
    key = jax.random.PRNGKey(0)
    kx, kh, kc, kw, kb = jax.random.split(key, 5)

    x = jax.random.normal(kx, (B, in_ch, H, W), jnp.float32)
    prev_h = jax.random.normal(kh, (B, hid_ch, H, W), jnp.float32)
    prev_c = jax.random.normal(kc, (B, hid_ch, H, W), jnp.float32)

    # Deterministic synthetic parameters (conv weight: (4*hid, in+hid, 3, 3)).
    C = in_ch + hid_ch
    w_oihw = 0.1 * jax.random.normal(kw, (4 * hid_ch, C, KSIZE, KSIZE), jnp.float32)
    bias = 0.1 * jax.random.normal(kb, (4 * hid_ch,), jnp.float32)

    # N = 512 here, so the >=2-step clamp gives tile_n=256 -> grid=(2,),
    # exercising the pipelined multi-step grid path.
    run = jax.jit(lambda *a: conv_lstm_cell(*a, hid_ch=hid_ch))
    hidden, cell = run(x, prev_h, prev_c, w_oihw, bias)
    jax.block_until_ready((hidden, cell))

    ref_h, ref_c = reference_conv_lstm_cell(x, prev_h, prev_c, w_oihw, bias, hid_ch)
    assert hidden.shape == (B, hid_ch, H, W) and cell.shape == (B, hid_ch, H, W)
    assert jnp.allclose(hidden, ref_h, atol=2e-2, rtol=2e-2)
    assert jnp.allclose(cell, ref_c, atol=2e-2, rtol=2e-2)

    print("KERNEL_OK")
</pallas_src>

<mosaic_0001>
module attributes {stable_mosaic.version = 11 : i64} {
  func.func @convlstm_kernel(%arg0: i32, %arg1: memref<112x256xbf16, #tpu.memory_space<vmem>>, %arg2: memref<32x112xbf16, #tpu.memory_space<vmem>>, %arg3: memref<32x1xf32, #tpu.memory_space<vmem>>, %arg4: memref<8x256xf32, #tpu.memory_space<vmem>>, %arg5: memref<8x256xbf16, #tpu.memory_space<vmem>>, %arg6: memref<8x256xf32, #tpu.memory_space<vmem>>) attributes {dimension_semantics = [#tpu.dimension_semantics<parallel>], iteration_bounds = array<i64: 2>, scalar_prefetch = 0 : i64, scratch_operands = 0 : i64, tpu.core_type = #tpu.core_type<tc>, window_params = [{transform_indices = @transform_0, window_bounds = array<i64: 112, 256>}, {pipeline_mode = #tpu.pipeline_mode<synchronous>, transform_indices = @transform_1, window_bounds = array<i64: 32, 112>}, {pipeline_mode = #tpu.pipeline_mode<synchronous>, transform_indices = @transform_2, window_bounds = array<i64: 32, 1>}, {transform_indices = @transform_3, window_bounds = array<i64: 8, 256>}, {transform_indices = @transform_4, window_bounds = array<i64: 8, 256>}, {transform_indices = @transform_5, window_bounds = array<i64: 8, 256>}]} {
    %c0 = arith.constant 0 : index
    %c0_0 = arith.constant 0 : index
    %0 = vector.load %arg2[%c0, %c0_0] : memref<32x112xbf16, #tpu.memory_space<vmem>>, vector<32x112xbf16>
    %c0_1 = arith.constant 0 : index
    %c0_2 = arith.constant 0 : index
    %1 = vector.load %arg1[%c0_1, %c0_2] : memref<112x256xbf16, #tpu.memory_space<vmem>>, vector<112x256xbf16>
    %cst = arith.constant dense<0.000000e+00> : vector<32x256xf32>
    %2 = tpu.matmul %0, %1, %cst {dimension_numbers = #tpu.dot_dimension_numbers<[1], [0], [0], [1], [0, 0, 1, 1], [], []>} : vector<32x112xbf16>, vector<112x256xbf16>, vector<32x256xf32> -> vector<32x256xf32>
    %c0_3 = arith.constant 0 : index
    %c0_4 = arith.constant 0 : index
    %3 = vector.load %arg3[%c0_3, %c0_4] : memref<32x1xf32, #tpu.memory_space<vmem>>, vector<32x1xf32>
    %4 = vector.broadcast %3 : vector<32x1xf32> to vector<32x256xf32>
    %5 = arith.addf %2, %4 : vector<32x256xf32>
    %6 = vector.extract_strided_slice %5 {offsets = [0, 0], sizes = [8, 256], strides = [1, 1]} : vector<32x256xf32> to vector<8x256xf32>
    %cst_5 = arith.constant 5.000000e-01 : f32
    %7 = vector.broadcast %cst_5 : f32 to vector<8x256xf32>
    %8 = arith.mulf %7, %6 : vector<8x256xf32>
    %9 = math.tanh %8 : vector<8x256xf32>
    %cst_6 = arith.constant 5.000000e-01 : f32
    %10 = vector.broadcast %cst_6 : f32 to vector<8x256xf32>
    %11 = arith.mulf %10, %9 : vector<8x256xf32>
    %cst_7 = arith.constant 5.000000e-01 : f32
    %12 = vector.broadcast %cst_7 : f32 to vector<8x256xf32>
    %13 = arith.addf %11, %12 : vector<8x256xf32>
    %14 = vector.extract_strided_slice %5 {offsets = [8, 0], sizes = [8, 256], strides = [1, 1]} : vector<32x256xf32> to vector<8x256xf32>
    %cst_8 = arith.constant 5.000000e-01 : f32
    %15 = vector.broadcast %cst_8 : f32 to vector<8x256xf32>
    %16 = arith.mulf %15, %14 : vector<8x256xf32>
    %17 = math.tanh %16 : vector<8x256xf32>
    %cst_9 = arith.constant 5.000000e-01 : f32
    %18 = vector.broadcast %cst_9 : f32 to vector<8x256xf32>
    %19 = arith.mulf %18, %17 : vector<8x256xf32>
    %cst_10 = arith.constant 5.000000e-01 : f32
    %20 = vector.broadcast %cst_10 : f32 to vector<8x256xf32>
    %21 = arith.addf %19, %20 : vector<8x256xf32>
    %22 = vector.extract_strided_slice %5 {offsets = [16, 0], sizes = [8, 256], strides = [1, 1]} : vector<32x256xf32> to vector<8x256xf32>
    %cst_11 = arith.constant 5.000000e-01 : f32
    %23 = vector.broadcast %cst_11 : f32 to vector<8x256xf32>
    %24 = arith.mulf %23, %22 : vector<8x256xf32>
    %25 = math.tanh %24 : vector<8x256xf32>
    %cst_12 = arith.constant 5.000000e-01 : f32
    %26 = vector.broadcast %cst_12 : f32 to vector<8x256xf32>
    %27 = arith.mulf %26, %25 : vector<8x256xf32>
    %cst_13 = arith.constant 5.000000e-01 : f32
    %28 = vector.broadcast %cst_13 : f32 to vector<8x256xf32>
    %29 = arith.addf %27, %28 : vector<8x256xf32>
    %30 = vector.extract_strided_slice %5 {offsets = [24, 0], sizes = [8, 256], strides = [1, 1]} : vector<32x256xf32> to vector<8x256xf32>
    %31 = math.tanh %30 : vector<8x256xf32>
    %c0_14 = arith.constant 0 : index
    %c0_15 = arith.constant 0 : index
    %32 = vector.load %arg4[%c0_14, %c0_15] : memref<8x256xf32, #tpu.memory_space<vmem>>, vector<8x256xf32>
    %33 = arith.mulf %21, %32 : vector<8x256xf32>
    %34 = arith.mulf %13, %31 : vector<8x256xf32>
    %35 = arith.addf %33, %34 : vector<8x256xf32>
    %c0_16 = arith.constant 0 : index
    %c0_17 = arith.constant 0 : index
    %36 = vector.load %arg6[%c0_16, %c0_17] : memref<8x256xf32, #tpu.memory_space<vmem>>, vector<8x256xf32>
    tpu.vector_store %arg6[%c0_16, %c0_17], %35 {strides = array<i32>} : memref<8x256xf32, #tpu.memory_space<vmem>>, vector<8x256xf32>,
    %37 = math.tanh %35 : vector<8x256xf32>
    %38 = arith.mulf %29, %37 : vector<8x256xf32>
    %39 = arith.truncf %38 : vector<8x256xf32> to vector<8x256xbf16>
    %c0_18 = arith.constant 0 : index
    %c0_19 = arith.constant 0 : index
    %40 = vector.load %arg5[%c0_18, %c0_19] : memref<8x256xbf16, #tpu.memory_space<vmem>>, vector<8x256xbf16>
    tpu.vector_store %arg5[%c0_18, %c0_19], %39 {strides = array<i32>} : memref<8x256xbf16, #tpu.memory_space<vmem>>, vector<8x256xbf16>,
    return
  }
  func.func @transform_0(%arg0: i32) -> (i32, i32) {
    %c0_i32 = arith.constant 0 : i32
    %c0_i32_0 = arith.constant 0 : i32
    return %c0_i32, %arg0 : i32, i32
  }
  func.func @transform_1(%arg0: i32) -> (i32, i32) {
    %c0_i32 = arith.constant 0 : i32
    %c0_i32_0 = arith.constant 0 : i32
    %c0_i32_1 = arith.constant 0 : i32
    return %c0_i32, %c0_i32_0 : i32, i32
  }
  func.func @transform_2(%arg0: i32) -> (i32, i32) {
    %c0_i32 = arith.constant 0 : i32
    %c0_i32_0 = arith.constant 0 : i32
    %c0_i32_1 = arith.constant 0 : i32
    return %c0_i32, %c0_i32_0 : i32, i32
  }
  func.func @transform_3(%arg0: i32) -> (i32, i32) {
    %c0_i32 = arith.constant 0 : i32
    %c0_i32_0 = arith.constant 0 : i32
    return %c0_i32, %arg0 : i32, i32
  }
  func.func @transform_4(%arg0: i32) -> (i32, i32) {
    %c0_i32 = arith.constant 0 : i32
    %c0_i32_0 = arith.constant 0 : i32
    return %c0_i32, %arg0 : i32, i32
  }
  func.func @transform_5(%arg0: i32) -> (i32, i32) {
    %c0_i32 = arith.constant 0 : i32
    %c0_i32_0 = arith.constant 0 : i32
    return %c0_i32, %arg0 : i32, i32
  }
}

</mosaic_0001>

<llo_original>
// kernel: _lambda_.1
$region0: #{_lambda_.1}
  #allocation0 [shape = 'u32[]', space=smem, size = 0x4, offset = 0x4, fixed_abs, tag = 'smem constant byte address 0x4 - core index']
  #allocation1 [shape = 'u32[144,128]{1,0:T(1,128)}', space=vmem, size = 0x12000, scoped, tag = 'internal scratch']
  %s0 = inlined_call_operand.vmem [shape: bf16[112,512], index: 0, kind: input, shape index: {}]
  %s1 = inlined_call_operand.vmem [shape: bf16[32,112], index: 1, kind: input, shape index: {}]
  %s2 = inlined_call_operand.vmem [shape: f32[32,1], index: 2, kind: input, shape index: {}]
  %s3 = inlined_call_operand.vmem [shape: f32[8,512], index: 3, kind: input, shape index: {}]
  %s4 = inlined_call_operand.vmem [shape: bf16[8,512], index: 4, kind: output, shape index: {0}]
  %s5 = inlined_call_operand.vmem [shape: f32[8,512], index: 5, kind: output, shape index: {1}]
  %6 = xla_tuple %s4, %s5
  %s7 = sld [smem:[#allocation0]]
  $region95: #{_lambda_.1} parent=0
    _
  %s9 = ssub.s32 1, %s7
  %s10 = scalar_select 0, %s9, %s7
  $region1: #{_lambda_.1} parent=0
    #allocation2 [shape = 'u8[114688]{0}', space=vmem, size = 0x1c000, scoped, tag = 'input window, operand 0']
    loop: start=0, step=1, limit=4
    $region2: #{_lambda_.1} parent=1 // loop_pre_header
      _
    $region3: #{_lambda_.1} parent=1 // loop_header
      %s12 = sphi 0, %s16
      %p13 = scmp.ge.s32.totalorder %s12, 4
      %s22 = sphi 0, %s24
      %s25 = sphi 0, %s22
      %s26 = sphi 0, %s25
      %s42 = sphi 0, %s26
      %s46 = sphi 0, %s46
      %s48 = sphi 0, %s46
      %s49 = sphi 0, %s48
      %s63 = sphi 0, %s49
      %s67 = sphi 0, %s67
      %s69 = sphi 0, %s67
      %s70 = sphi 0, %s69
      %s84 = sphi 0, %s70
      %s90 = sphi 0, %s92
      %s93 = sphi 0, %s90
      %s94 = sphi 0, %s93
      %s110 = sphi 0, %s94
      %s116 = sphi 0, %s118
      %s119 = sphi 0, %s116
      %s120 = sphi 0, %s119
      %s136 = sphi 0, %s120
      %s142 = sphi 0, %s144
      %s145 = sphi 0, %s142
      %s146 = sphi 0, %s145
      %s162 = sphi 0, %s146
    $region4: #{_lambda_.1} parent=1 // loop_header_branch
      %15 = sbr.rel (%p13) target = $region8
    $region5: #{_lambda_.1} parent=1 // loop_body
      %s17 = ssub.s32 %s12, 1
      %s18 = ssub.s32 %s12, 2
      %s19 = sadd.s32 %s12, 1
      %s20 = ssub.s32 %s12, %s19
      %p21 = scmp.eq.s32.totalorder %s20, 0
      %s23 = sadd.s32 %s22, 1
      %s24 = scalar_select %p21, %s22, %s23
      %p27 = pneg %p21
      %p28 = scmp.eq.s32.totalorder %s12, 1
      %p29 = por %p27, %p28
      %p30 = scmp.ne.s32.totalorder %s22, %s25
      %p31 = scmp.eq.s32.totalorder %s12, 0
      %p32 = por %p30, %p31
      %p33 = scmp.ne.s32.totalorder %s22, %s25
      %p34 = scmp.eq.s32.totalorder %s17, 1
      %p35 = por %p33, %p34
      %p36 = scmp.ne.s32.totalorder %s25, %s26
      %p37 = scmp.eq.s32.totalorder %s17, 0
      %p38 = por %p36, %p37
      %p39 = scmp.ne.s32.totalorder %s25, %s26
      %p40 = scmp.eq.s32.totalorder %s18, 1
      %p41 = por %p39, %p40
      %p43 = scmp.ne.s32.totalorder %s26, %s42
      %p44 = scmp.eq.s32.totalorder %s18, 0
      %p45 = por %p43, %p44
      %s47 = sadd.s32 %s46, 1
      %p50 = scmp.eq.s32.totalorder %s12, 1
      %p51 = scmp.ne.s32.totalorder %s46, %s48
      %p52 = scmp.eq.s32.totalorder %s12, 0
      %p53 = por %p51, %p52
      %p54 = scmp.ne.s32.totalorder %s46, %s48
      %p55 = scmp.eq.s32.totalorder %s17, 1
      %p56 = por %p54, %p55
      %p57 = scmp.ne.s32.totalorder %s48, %s49
      %p58 = scmp.eq.s32.totalorder %s17, 0
      %p59 = por %p57, %p58
      %p60 = scmp.ne.s32.totalorder %s48, %s49
      %p61 = scmp.eq.s32.totalorder %s18, 1
      %p62 = por %p60, %p61
      %p64 = scmp.ne.s32.totalorder %s49, %s63
      %p65 = scmp.eq.s32.totalorder %s18, 0
      %p66 = por %p64, %p65
      %s68 = sadd.s32 %s67, 1
      %p71 = scmp.eq.s32.totalorder %s12, 1
      %p72 = scmp.ne.s32.totalorder %s67, %s69
      %p73 = scmp.eq.s32.totalorder %s12, 0
      %p74 = por %p72, %p73
      %p75 = scmp.ne.s32.totalorder %s67, %s69
      %p76 = scmp.eq.s32.totalorder %s17, 1
      %p77 = por %p75, %p76
      %p78 = scmp.ne.s32.totalorder %s69, %s70
      %p79 = scmp.eq.s32.totalorder %s17, 0
      %p80 = por %p78, %p79
      %p81 = scmp.ne.s32.totalorder %s69, %s70
      %p82 = scmp.eq.s32.totalorder %s18, 1
      %p83 = por %p81, %p82
      %p85 = scmp.ne.s32.totalorder %s70, %s84
      %p86 = scmp.eq.s32.totalorder %s18, 0
      %p87 = por %p85, %p86
      %s88 = ssub.s32 %s12, %s19
      %p89 = scmp.eq.s32.totalorder %s88, 0
      %s91 = sadd.s32 %s90, 1
      %s92 = scalar_select %p89, %s90, %s91
      %p95 = pneg %p89
      %p96 = scmp.eq.s32.totalorder %s12, 1
      %p97 = por %p95, %p96
      %p98 = scmp.ne.s32.totalorder %s90, %s93
      %p99 = scmp.eq.s32.totalorder %s12, 0
      %p100 = por %p98, %p99
      %p101 = scmp.ne.s32.totalorder %s90, %s93
      %p102 = scmp.eq.s32.totalorder %s17, 1
      %p103 = por %p101, %p102
      %p104 = scmp.ne.s32.totalorder %s93, %s94
      %p105 = scmp.eq.s32.totalorder %s17, 0
      %p106 = por %p104, %p105
      %p107 = scmp.ne.s32.totalorder %s93, %s94
      %p108 = scmp.eq.s32.totalorder %s18, 1
      %p109 = por %p107, %p108
      %p111 = scmp.ne.s32.totalorder %s94, %s110
      %p112 = scmp.eq.s32.totalorder %s18, 0
      %p113 = por %p111, %p112
      %s114 = ssub.s32 %s12, %s19
      %p115 = scmp.eq.s32.totalorder %s114, 0
      %s117 = sadd.s32 %s116, 1
      %s118 = scalar_select %p115, %s116, %s117
      %p121 = pneg %p115
      %p122 = scmp.eq.s32.totalorder %s12, 1
      %p123 = por %p121, %p122
      %p124 = scmp.ne.s32.totalorder %s116, %s119
      %p125 = scmp.eq.s32.totalorder %s12, 0
      %p126 = por %p124, %p125
      %p127 = scmp.ne.s32.totalorder %s116, %s119
      %p128 = scmp.eq.s32.totalorder %s17, 1
      %p129 = por %p127, %p128
      %p130 = scmp.ne.s32.totalorder %s119, %s120
      %p131 = scmp.eq.s32.totalorder %s17, 0
      %p132 = por %p130, %p131
      %p133 = scmp.ne.s32.totalorder %s119, %s120
      %p134 = scmp.eq.s32.totalorder %s18, 1
      %p135 = por %p133, %p134
      %p137 = scmp.ne.s32.totalorder %s120, %s136
      %p138 = scmp.eq.s32.totalorder %s18, 0
      %p139 = por %p137, %p138
      %s140 = ssub.s32 %s12, %s19
      %p141 = scmp.eq.s32.totalorder %s140, 0
      %s143 = sadd.s32 %s142, 1
      %s144 = scalar_select %p141, %s142, %s143
      %p147 = pneg %p141
      %p148 = scmp.eq.s32.totalorder %s12, 1
      %p149 = por %p147, %p148
      %p150 = scmp.ne.s32.totalorder %s142, %s145
      %p151 = scmp.eq.s32.totalorder %s12, 0
      %p152 = por %p150, %p151
      %p153 = scmp.ne.s32.totalorder %s142, %s145
      %p154 = scmp.eq.s32.totalorder %s17, 1
      %p155 = por %p153, %p154
      %p156 = scmp.ne.s32.totalorder %s145, %s146
      %p157 = scmp.eq.s32.totalorder %s17, 0
      %p158 = por %p156, %p157
      %p159 = scmp.ne.s32.totalorder %s145, %s146
      %p160 = scmp.eq.s32.totalorder %s18, 1
      %p161 = por %p159, %p160
      %p163 = scmp.ne.s32.totalorder %s146, %s162
      %p164 = scmp.eq.s32.totalorder %s18, 0
      %p165 = por %p163, %p164
      %p166 = scmp.le.s32.totalorder 1, %s12
      %p167 = scmp.lt.s32.totalorder %s12, 3
      %p168 = pnand %p166, %p167
      %p169 = pneg %p168
      // Predicated region
      $region9: #{_lambda_.1} parent=5 // pred_check
        _
      $region10: #{_lambda_.1} parent=5 // pred_check_branch
        %171 = sbr.rel (%p168) target = $region12
      $region11: #{_lambda_.1} parent=5 // pred_region
        %s172 = ssub.s32 %s12, 1
        // Predicated region
        $region13: #{_lambda_.1} parent=11 // pred_check
          %p173 = pneg %p59
        $region14: #{_lambda_.1} parent=11 // pred_check_branch
          %175 = sbr.rel (%p173) target = $region16
        $region15: #{_lambda_.1} parent=11 // pred_region
          _
        $region16: #{_lambda_.1} parent=11 // pred_fallthru
          _
        // Predicated region
        $region17: #{_lambda_.1} parent=11 // pred_check
          %p176 = pneg %p80
        $region18: #{_lambda_.1} parent=11 // pred_check_branch
          %178 = sbr.rel (%p176) target = $region20
        $region19: #{_lambda_.1} parent=11 // pred_region
          _
        $region20: #{_lambda_.1} parent=11 // pred_fallthru
          _
      $region12: #{_lambda_.1} parent=5 // pred_fallthru
        _
      %p179 = scmp.lt.s32.totalorder %s12, 2
      // Predicated region
      $region21: #{_lambda_.1} parent=5 // pred_check
        %p180 = pneg %p179
      $region22: #{_lambda_.1} parent=5 // pred_check_branch
        %182 = sbr.rel (%p180) target = $region24
      $region23: #{_lambda_.1} parent=5 // pred_region
        // Predicated region
        $region25: #{_lambda_.1} parent=23 // pred_check
          %p183 = pneg %p32
        $region26: #{_lambda_.1} parent=23 // pred_check_branch
          %185 = sbr.rel (%p183) target = $region28
        $region27: #{_lambda_.1} parent=23 // pred_region
          %s186 = sand.u32 %s22, 1
          %s187 = sand.u32 %s22, 1
          %s188 = smul.addr %s187, 112
          %s189 = scalar_lea.vmem [#allocation2], %s188
          %s190 = smul.u32 2, %s12
          %s191 = smul.addr %s190, 4
          %s192 = scalar_lea.vmem %s0, %s191
          // Predicated region
          $region29: #{_lambda_.1} parent=27 // pred_check
            _
          $region30: #{_lambda_.1} parent=27 // pred_check_branch
            %194 = sbr.rel (0) target = $region32
          $region31: #{_lambda_.1} parent=27 // pred_region
            // Predicated region
            $region33: #{_lambda_.1} parent=31 // pred_check
              _
            $region34: #{_lambda_.1} parent=31 // pred_check_branch
              %196 = sbr.rel (0) target = $region36
            $region35: #{_lambda_.1} parent=31 // pred_region
              // Predicated region
              $region48: #{_lambda_.1} parent=35 // pred_check
                _
              $region49: #{_lambda_.1} parent=35 // pred_check_branch
                %237 = sbr.rel (0) target = $region51
              $region50: #{_lambda_.1} parent=35 // pred_region
                loop: start=0, step=1, limit=1
                $region52: #{_lambda_.1} parent=50 // loop_pre_header
                  _
                $region53: #{_lambda_.1} parent=50 // loop_header
                  %s239 = sphi 0, %s243
                  %p240 = scmp.ge.s32.totalorder %s239, 1
                  %s244 = sphi %s192, %s192
                  %s245 = sphi %s189, %s189
                $region54: #{_lambda_.1} parent=50 // loop_header_branch
                  %242 = sbr.rel (%p240) target = $region58
                $region55: #{_lambda_.1} parent=50 // loop_body
                  %v246 = vld [vmem:[%s244] sm:$0xff]
                  %247 = vst [vmem:[%s245] sm:$0xff] %v246
                  %v248 = vld [vmem:[%s244 + $0x10] sm:$0xff]
                  %249 = vst [vmem:[%s245 + $0x8] sm:$0xff] %v248
                  %v250 = vld [vmem:[%s244 + $0x20] sm:$0xff]
                  %251 = vst [vmem:[%s245 + $0x10] sm:$0xff] %v250
                  %v252 = vld [vmem:[%s244 + $0x30] sm:$0xff]
                  %253 = vst [vmem:[%s245 + $0x18] sm:$0xff] %v252
                  %v254 = vld [vmem:[%s244 + $0x40] sm:$0xff]
                  %255 = vst [vmem:[%s245 + $0x20] sm:$0xff] %v254
                  %v256 = vld [vmem:[%s244 + $0x50] sm:$0xff]
                  %257 = vst [vmem:[%s245 + $0x28] sm:$0xff] %v256
                  %v258 = vld [vmem:[%s244 + $0x60] sm:$0xff]
                  %259 = vst [vmem:[%s245 + $0x30] sm:$0xff] %v258
                  %v260 = vld [vmem:[%s244 + $0x70] sm:$0xff]
                  %261 = vst [vmem:[%s245 + $0x38] sm:$0xff] %v260
                  %v262 = vld [vmem:[%s244 + $0x80] sm:$0xff]
                  %263 = vst [vmem:[%s245 + $0x40] sm:$0xff] %v262
                  %v264 = vld [vmem:[%s244 + $0x90] sm:$0xff]
                  %265 = vst [vmem:[%s245 + $0x48] sm:$0xff] %v264
                  %v266 = vld [vmem:[%s244 + $0xa0] sm:$0xff]
                  %267 = vst [vmem:[%s245 + $0x50] sm:$0xff] %v266
                  %v268 = vld [vmem:[%s244 + $0xb0] sm:$0xff]
                  %269 = vst [vmem:[%s245 + $0x58] sm:$0xff] %v268
                  %v270 = vld [vmem:[%s244 + $0xc0] sm:$0xff]
                  %271 = vst [vmem:[%s245 + $0x60] sm:$0xff] %v270
                  %v272 = vld [vmem:[%s244 + $0xd0] sm:$0xff]
                  %273 = vst [vmem:[%s245 + $0x68] sm:$0xff] %v272
                $region56: #{_lambda_.1} parent=50 // loop_footer
                  %s243 = sadd.s32 1, %s239
                $region57: #{_lambda_.1} parent=50 // loop_footer_branch
                  %238 = sbr.rel target = $region53
                $region58: #{_lambda_.1} parent=50 // loop_exit
                  _
              $region51: #{_lambda_.1} parent=35 // pred_fallthru
                _
              // Predicated region
              $region59: #{_lambda_.1} parent=35 // pred_check
                _
              $region60: #{_lambda_.1} parent=35 // pred_check_branch
                %275 = sbr.rel target = $region62
              $region61: #{_lambda_.1} parent=35 // pred_region
                _
              $region62: #{_lambda_.1} parent=35 // pred_fallthru
                _
            $region36: #{_lambda_.1} parent=31 // pred_fallthru
              _
            // Predicated region
            $region37: #{_lambda_.1} parent=31 // pred_check
              _
            $region38: #{_lambda_.1} parent=31 // pred_check_branch
              %198 = sbr.rel target = $region40
            $region39: #{_lambda_.1} parent=31 // pred_region
              loop: start=0, step=1, limit=1
              $region41: #{_lambda_.1} parent=39 // loop_pre_header
                _
              $region42: #{_lambda_.1} parent=39 // loop_header
                %s201 = sphi 0, %s205
                %p202 = scmp.ge.s32.totalorder %s201, 1
                %s206 = sphi %s192, %s192
                %s207 = sphi %s189, %s189
              $region43: #{_lambda_.1} parent=39 // loop_header_branch
                %204 = sbr.rel (%p202) target = $region47
              $region44: #{_lambda_.1} parent=39 // loop_body
                %v208 = vld [vmem:[%s206] sm:$0xff]
                %209 = vst [vmem:[%s207] sm:$0xff] %v208
                %v210 = vld [vmem:[%s206 + $0x10] sm:$0xff]
                %211 = vst [vmem:[%s207 + $0x8] sm:$0xff] %v210
                %v212 = vld [vmem:[%s206 + $0x20] sm:$0xff]
                %213 = vst [vmem:[%s207 + $0x10] sm:$0xff] %v212
                %v214 = vld [vmem:[%s206 + $0x30] sm:$0xff]
                %215 = vst [vmem:[%s207 + $0x18] sm:$0xff] %v214
                %v216 = vld [vmem:[%s206 + $0x40] sm:$0xff]
                %217 = vst [vmem:[%s207 + $0x20] sm:$0xff] %v216
                %v218 = vld [vmem:[%s206 + $0x50] sm:$0xff]
                %219 = vst [vmem:[%s207 + $0x28] sm:$0xff] %v218
                %v220 = vld [vmem:[%s206 + $0x60] sm:$0xff]
                %221 = vst [vmem:[%s207 + $0x30] sm:$0xff] %v220
                %v222 = vld [vmem:[%s206 + $0x70] sm:$0xff]
                %223 = vst [vmem:[%s207 + $0x38] sm:$0xff] %v222
                %v224 = vld [vmem:[%s206 + $0x80] sm:$0xff]
                %225 = vst [vmem:[%s207 + $0x40] sm:$0xff] %v224
                %v226 = vld [vmem:[%s206 + $0x90] sm:$0xff]
                %227 = vst [vmem:[%s207 + $0x48] sm:$0xff] %v226
                %v228 = vld [vmem:[%s206 + $0xa0] sm:$0xff]
                %229 = vst [vmem:[%s207 + $0x50] sm:$0xff] %v228
                %v230 = vld [vmem:[%s206 + $0xb0] sm:$0xff]
                %231 = vst [vmem:[%s207 + $0x58] sm:$0xff] %v230
                %v232 = vld [vmem:[%s206 + $0xc0] sm:$0xff]
                %233 = vst [vmem:[%s207 + $0x60] sm:$0xff] %v232
                %v234 = vld [vmem:[%s206 + $0xd0] sm:$0xff]
                %235 = vst [vmem:[%s207 + $0x68] sm:$0xff] %v234
              $region45: #{_lambda_.1} parent=39 // loop_footer
                %s205 = sadd.s32 1, %s201
              $region46: #{_lambda_.1} parent=39 // loop_footer_branch
                %200 = sbr.rel target = $region42
              $region47: #{_lambda_.1} parent=39 // loop_exit
                _
            $region40: #{_lambda_.1} parent=31 // pred_fallthru
              _
          $region32: #{_lambda_.1} parent=27 // pred_fallthru
            _
          %276 = vnop
        $region28: #{_lambda_.1} parent=23 // pred_fallthru
          _
        // Predicated region
        $region63: #{_lambda_.1} parent=23 // pred_check
          %p277 = pneg %p100
        $region64: #{_lambda_.1} parent=23 // pred_check_branch
          %279 = sbr.rel (%p277) target = $region66
        $region65: #{_lambda_.1} parent=23 // pred_region
          %s280 = smul.u32 2, %s12
          %p281 = scmp.lt.s32.totalorder %s280, 3
          %s282 = scalar_select %p281, %s280, 3
          %s283 = smul.addr %s282, 8
          %s284 = scalar_lea.vmem %s3, %s283
          %s285 = smul.u32 2, %s12
        $region66: #{_lambda_.1} parent=23 // pred_fallthru
          _
      $region24: #{_lambda_.1} parent=5 // pred_fallthru
        _
      %p286 = scmp.le.s32.totalorder 1, %s12
      %p287 = scmp.lt.s32.totalorder %s12, 3
      %p288 = pnand %p286, %p287
      %p289 = pneg %p288
      // Predicated region
      $region67: #{_lambda_.1} parent=5 // pred_check
        _
      $region68: #{_lambda_.1} parent=5 // pred_check_branch
        %291 = sbr.rel (%p288) target = $region70
      $region69: #{_lambda_.1} parent=5 // pred_region
        %s292 = ssub.s32 %s12, 1
        %s293 = sand.u32 %s25, 1
        %s294 = sand.u32 %s25, 1
        %s295 = smul.addr %s294, 112
        %s296 = scalar_lea.vmem [#allocation2], %s295
        // Predicated region
        $region71: #{_lambda_.1} parent=69 // pred_check
          %p297 = pneg %p38
        $region72: #{_lambda_.1} parent=69 // pred_check_branch
          %299 = sbr.rel (%p297) target = $region74
        $region73: #{_lambda_.1} parent=69 // pred_region
          _
        $region74: #{_lambda_.1} parent=69 // pred_fallthru
          _
        %s300 = sand.u32 %s25, 1
        %s301 = sand.u32 %s25, 1
        %s302 = smul.addr %s301, 112
        %s303 = scalar_lea.vmem [#allocation2], %s302
        %p304 = pneg %p38
        %p305 = pneg %p35
        %p306 = pneg %p59
        %p307 = pneg %p56
        %p308 = pneg %p80
        %p309 = pneg %p77
        %s310 = smul.u32 2, %s17
        %p311 = scmp.lt.s32.totalorder %s310, 3
        %s312 = scalar_select %p311, %s310, 3
        %s313 = smul.addr %s312, 8
        %s314 = scalar_lea.vmem %s3, %s313
        %p315 = pneg %p106
        %p316 = pneg %p103
        %p317 = pneg %p132
        %p318 = pneg %p129
        %s319 = smul.u32 2, %s17
        %p320 = scmp.lt.s32.totalorder %s319, 3
        %s321 = scalar_select %p320, %s319, 3
        %s322 = smul.addr %s321, 4
        %s323 = scalar_lea.vmem %s4, %s322
        %p324 = pneg %p158
        %p325 = pneg %p155
        %s326 = smul.u32 2, %s17
        %p327 = scmp.lt.s32.totalorder %s326, 3
        %s328 = scalar_select %p327, %s326, 3
        %s329 = smul.addr %s328, 8
        %s330 = scalar_lea.vmem %s5, %s329
        %s331 = smul.u32 2, %s17
        %s332 = smul.u32 2, %s17
        %p333 = scmp.lt.s32.totalorder %s332, 3
        %s334 = scalar_select %p333, %s332, 3
        %s335 = smul.addr %s334, 8
        %s336 = scalar_lea.vmem %s3, %s335
        %s337 = smul.u32 2, %s17
        %s338 = smul.u32 2, %s17
        %p339 = scmp.lt.s32.totalorder %s338, 3
        %s340 = scalar_select %p339, %s338, 3
        %s341 = smul.addr %s340, 4
        %s342 = scalar_lea.vmem %s4, %s341
        %s343 = smul.u32 2, %s17
        %s344 = smul.u32 2, %s17
        %p345 = scmp.lt.s32.totalorder %s344, 3
        %s346 = scalar_select %p345, %s344, 3
        %s347 = smul.addr %s346, 8
        %s348 = scalar_lea.vmem %s5, %s347
        %s349 = smul.u32 2, %s17
        %v351 = vld [vmem:[%s1] sm:$0xf]
        %v352 = vld [vmem:[%s1 + $0x4] sm:$0xf]
        %v353 = vld [vmem:[%s1 + $0x8] sm:$0xf]
        %v354 = vld [vmem:[%s1 + $0xc] sm:$0xf]
        %v355 = vld [vmem:[%s296] sm:$0xff]
        %v356 = vld [vmem:[%s296 + $0x8] sm:$0xff]
        %v357 = vld [vmem:[%s296 + $0x10] sm:$0xff]
        %v358 = vld [vmem:[%s296 + $0x18] sm:$0xff]
        %v359 = vld [vmem:[%s296 + $0x20] sm:$0xff]
        %v360 = vld [vmem:[%s296 + $0x28] sm:$0xff]
        %v361 = vld [vmem:[%s296 + $0x30] sm:$0xff]
        %v362 = vld [vmem:[%s296 + $0x38] sm:$0xff]
        %v363 = vld [vmem:[%s296 + $0x40] sm:$0xff]
        %v364 = vld [vmem:[%s296 + $0x48] sm:$0xff]
        %v365 = vld [vmem:[%s296 + $0x50] sm:$0xff]
        %v366 = vld [vmem:[%s296 + $0x58] sm:$0xff]
        %v367 = vld [vmem:[%s296 + $0x60] sm:$0xff]
        %v368 = vld [vmem:[%s296 + $0x68] sm:$0xff]
        %v369 = vld [vmem:[%s2] sm:$0xff]
        %v370 = vld [vmem:[%s2 + $0x8] sm:$0xff]
        %v371 = vld [vmem:[%s2 + $0x10] sm:$0xff]
        %v372 = vld [vmem:[%s2 + $0x18] sm:$0xff]
        %374 = vset.pattern.permute.xlu0 0
        %375 = vperm.xlu0 %374, %v369
        %v376 = vpop.permute.xlu0 %375
        %379 = vset.pattern.permute.xlu0 0
        %380 = vperm.xlu0 %379, %v370
        %v381 = vpop.permute.xlu0 %380
        %384 = vset.pattern.permute.xlu0 0
        %385 = vperm.xlu0 %384, %v371
        %v386 = vpop.permute.xlu0 %385
        %389 = vset.pattern.permute.xlu0 0
        %390 = vperm.xlu0 %389, %v372
        %v391 = vpop.permute.xlu0 %390
        %v397 = vunpack.c.l.b16 %v351
        %v398 = vunpack.c.l.b16 %v352
        %v399 = vunpack.c.l.b16 %v353
        %v400 = vunpack.c.l.b16 %v354
        %v401 = vpack.c.b16 %v398, %v397
        %v402 = vpack.c.b16 %v400, %v399
        %v417 = vunpack.c.l.b16 %v355
        %v418 = vunpack.c.h.b16 %v355
        %v419 = vunpack.c.l.b16 %v356
        %v420 = vunpack.c.h.b16 %v356
        %v421 = vunpack.c.l.b16 %v357
        %v422 = vunpack.c.h.b16 %v357
        %v423 = vunpack.c.l.b16 %v358
        %v424 = vunpack.c.h.b16 %v358
        %v425 = vunpack.c.l.b16 %v359
        %v426 = vunpack.c.h.b16 %v359
        %v427 = vunpack.c.l.b16 %v360
        %v428 = vunpack.c.h.b16 %v360
        %v429 = vunpack.c.l.b16 %v361
        %v430 = vunpack.c.h.b16 %v361
        %v431 = vunpack.c.l.b16 %v362
        %v432 = vunpack.c.h.b16 %v362
        %v433 = vunpack.c.l.b16 %v363
        %v434 = vunpack.c.h.b16 %v363
        %v435 = vunpack.c.l.b16 %v364
        %v436 = vunpack.c.h.b16 %v364
        %v437 = vunpack.c.l.b16 %v365
        %v438 = vunpack.c.h.b16 %v365
        %v439 = vunpack.c.l.b16 %v366
        %v440 = vunpack.c.h.b16 %v366
        %v441 = vunpack.c.l.b16 %v367
        %v442 = vunpack.c.h.b16 %v367
        %v443 = vunpack.c.l.b16 %v368
        %v444 = vunpack.c.h.b16 %v368
        %v445 = vpack.c.b16 %v419, %v417
        %v446 = vpack.c.b16 %v420, %v418
        %v447 = vpack.c.b16 %v423, %v421
        %v448 = vpack.c.b16 %v424, %v422
        %v449 = vpack.c.b16 %v427, %v425
        %v450 = vpack.c.b16 %v428, %v426
        %v451 = vpack.c.b16 %v431, %v429
        %v452 = vpack.c.b16 %v432, %v430
        %v453 = vpack.c.b16 %v435, %v433
        %v454 = vpack.c.b16 %v436, %v434
        %v455 = vpack.c.b16 %v439, %v437
        %v456 = vpack.c.b16 %v440, %v438
        %v457 = vpack.c.b16 %v443, %v441
        %v458 = vpack.c.b16 %v444, %v442
        %vm473 = vcmask 916480
        %v475 = vsel %vm473, %v401, 0
        %v478 = vsel %vm473, %v402, 0
        %480 = vmatprep.subr.bf16.mxu0 %v446
        %481 = vmatpush1.bf16.msra.mxu0 %v445
        %482 = vmatprep.subr.bf16.mxu0 %v448
        %483 = vmatpush1.bf16.msra.mxu0 %v447
        %484 = vmatprep.subr.bf16.mxu0 %v450
        %485 = vmatpush1.bf16.msra.mxu0 %v449
        %486 = vmatprep.subr.bf16.mxu0 %v452
        %487 = vmatpush1.bf16.msra.mxu0 %v451
        %488 = vmatprep.subr.bf16.mxu0 %v454
        %489 = vmatpush1.bf16.msra.mxu0 %v453
        %490 = vmatprep.subr.bf16.mxu0 %v456
        %491 = vmatpush1.bf16.msra.mxu0 %v455
        %492 = vmatprep.subr.bf16.mxu0 %v458
        %493 = vmatpush1.bf16.msra.mxu0 %v457
        %494 = vmatprep.subr.bf16.mxu0 0
        %495 = vmatpush1.bf16.msra.mxu0 0
        %496 = vmatprep.subr.bf16.mxu0 0
        %497 = vmatpush1.bf16.msra.mxu0 0
        %498 = vmatprep.subr.bf16.mxu0 0
        %499 = vmatpush1.bf16.msra.mxu0 0
        %500 = vmatprep.subr.bf16.mxu0 0
        %501 = vmatpush1.bf16.msra.mxu0 0
        %502 = vmatprep.subr.bf16.mxu0 0
        %503 = vmatpush1.bf16.msra.mxu0 0
        %504 = vmatprep.subr.bf16.mxu0 0
        %505 = vmatpush1.bf16.msra.mxu0 0
        %506 = vmatprep.subr.bf16.mxu0 0
        %507 = vmatpush1.bf16.msra.mxu0 0
        %508 = vmatprep.subr.bf16.mxu0 0
        %509 = vmatpush1.bf16.msra.mxu0 0
        %510 = vmatprep.subr.bf16.mxu0 0
        %511 = vmatpush1.bf16.msra.mxu0 0
        %512 = vmatprep.mubr.bf16.mxu0 0
        %513 = vmatmul.mubr.bf16.gmra.mrb[0].mxu0 %v475
        %v514 = vpop.f32.mrb[0].mxu0
        %v515 = vadd.f32 %v376, %v514
        %v516 = vpop.f32.mrb[0].mxu0
        %v517 = vadd.f32 %v376, %v516
        %v518 = vpop.f32.mrb[0].mxu0
        %v519 = vadd.f32 %v381, %v518
        %v520 = vpop.f32.mrb[0].mxu0
        %v521 = vadd.f32 %v381, %v520
        %522 = vmatprep.mubr.bf16.mxu0 0
        %523 = vmatmul.mubr.bf16.gmra.mrb[0].mxu0 %v478
        %v524 = vpop.f32.mrb[0].mxu0
        %v525 = vadd.f32 %v386, %v524
        %v526 = vpop.f32.mrb[0].mxu0
        %v527 = vadd.f32 %v386, %v526
        %v528 = vpop.f32.mrb[0].mxu0
        %v529 = vadd.f32 %v391, %v528
        %v530 = vpop.f32.mrb[0].mxu0
        %v531 = vadd.f32 %v391, %v530
        %532 = vdwg.mxu0
        %v533 = vmul.f32 %v515, 0.5
        %v534 = vmul.f32 %v517, 0.5
        %v535 = vtanh.pop %v533
        %v536 = vtanh.pop %v534
        %v537 = vmul.f32 %v535, 0.5
        %v538 = vmul.f32 %v536, 0.5
        %v539 = vadd.f32 %v537, 0.5
        %v540 = vadd.f32 %v538, 0.5
        %v541 = vmul.f32 %v519, 0.5
        %v542 = vmul.f32 %v521, 0.5
        %v543 = vtanh.pop %v541
        %v544 = vtanh.pop %v542
        %v545 = vmul.f32 %v543, 0.5
        %v546 = vmul.f32 %v544, 0.5
        %v547 = vadd.f32 %v545, 0.5
        %v548 = vadd.f32 %v546, 0.5
        %v549 = vmul.f32 %v525, 0.5
        %v550 = vmul.f32 %v527, 0.5
        %v551 = vtanh.pop %v549
        %v552 = vtanh.pop %v550
        %v553 = vmul.f32 %v551, 0.5
        %v554 = vmul.f32 %v552, 0.5
        %v555 = vadd.f32 %v553, 0.5
        %v556 = vadd.f32 %v554, 0.5
        %v557 = vtanh.pop %v529
        %v558 = vtanh.pop %v531
        %v559 = vld [vmem:[%s336] sm:$0xff]
        %v560 = vld [vmem:[%s336 + $0x8] sm:$0xff]
        %v561 = vmul.f32 %v547, %v559
        %v562 = vmul.f32 %v548, %v560
        %v563 = vmul.f32 %v539, %v557
        %v564 = vmul.f32 %v540, %v558
        %v565 = vadd.f32 %v561, %v563
        %v566 = vadd.f32 %v562, %v564
        %567 = vst [vmem:[%s348] sm:$0xff] %v565
        %568 = vst [vmem:[%s348 + $0x8] sm:$0xff] %v566
        %v569 = vtanh.pop %v565
        %v570 = vtanh.pop %v566
        %v571 = vmul.f32 %v555, %v569
        %v572 = vmul.f32 %v556, %v570
        %v573 = vpack.c.bf16 %v571, %v571
        %v574 = vpack.c.bf16 %v572, %v572
        %v577 = vunpack.c.l.b16 %v573
        %v578 = vunpack.c.l.b16 %v574
        %v579 = vpack.c.b16 %v578, %v577
        %581 = vst [vmem:[%s342] sm:$0xff] %v579
        %s582 = smul.u32 2, %s17
        %p583 = scmp.lt.s32.totalorder %s582, 3
        %s584 = scalar_select %p583, %s582, 3
        %s585 = smul.addr %s584, 4
        %s586 = scalar_lea.vmem %s4, %s585
        %s587 = smul.u32 2, %s17
        %p588 = scmp.lt.s32.totalorder %s587, 3
        %s589 = scalar_select %p588, %s587, 3
        %s590 = smul.addr %s589, 8
        %s591 = scalar_lea.vmem %s5, %s590
        // Predicated region
        $region75: #{_lambda_.1} parent=69 // pred_check
          %p592 = pneg %p129
        $region76: #{_lambda_.1} parent=69 // pred_check_branch
          %594 = sbr.rel (%p592) target = $region78
        $region77: #{_lambda_.1} parent=69 // pred_region
          %s595 = smul.u32 2, %s17
        $region78: #{_lambda_.1} parent=69 // pred_fallthru
          _
        // Predicated region
        $region79: #{_lambda_.1} parent=69 // pred_check
          %p596 = pneg %p155
        $region80: #{_lambda_.1} parent=69 // pred_check_branch
          %598 = sbr.rel (%p596) target = $region82
        $region81: #{_lambda_.1} parent=69 // pred_region
          %s599 = smul.u32 2, %s17
        $region82: #{_lambda_.1} parent=69 // pred_fallthru
          _
      $region70: #{_lambda_.1} parent=5 // pred_fallthru
        _
      %p600 = scmp.le.s32.totalorder 2, %s12
      // Predicated region
      $region83: #{_lambda_.1} parent=5 // pred_check
        %p601 = pneg %p600
      $region84: #{_lambda_.1} parent=5 // pred_check_branch
        %603 = sbr.rel (%p601) target = $region86
      $region85: #{_lambda_.1} parent=5 // pred_region
        %s604 = ssub.s32 %s12, 2
        // Predicated region
        $region87: #{_lambda_.1} parent=85 // pred_check
          %p605 = pneg %p135
        $region88: #{_lambda_.1} parent=85 // pred_check_branch
          %607 = sbr.rel (%p605) target = $region90
        $region89: #{_lambda_.1} parent=85 // pred_region
          %s608 = smul.u32 2, %s18
          %p609 = scmp.lt.s32.totalorder %s608, 3
          %s610 = scalar_select %p609, %s608, 3
          %s611 = smul.addr %s610, 4
          %s612 = scalar_lea.vmem %s4, %s611
        $region90: #{_lambda_.1} parent=85 // pred_fallthru
          _
        // Predicated region
        $region91: #{_lambda_.1} parent=85 // pred_check
          %p613 = pneg %p161
        $region92: #{_lambda_.1} parent=85 // pred_check_branch
          %615 = sbr.rel (%p613) target = $region94
        $region93: #{_lambda_.1} parent=85 // pred_region
          %s616 = smul.u32 2, %s18
          %p617 = scmp.lt.s32.totalorder %s616, 3
          %s618 = scalar_select %p617, %s616, 3
          %s619 = smul.addr %s618, 8
          %s620 = scalar_lea.vmem %s5, %s619
        $region94: #{_lambda_.1} parent=85 // pred_fallthru
          _
      $region86: #{_lambda_.1} parent=5 // pred_fallthru
        _
    $region6: #{_lambda_.1} parent=1 // loop_footer
      %s16 = sadd.s32 1, %s12
    $region7: #{_lambda_.1} parent=1 // loop_footer_branch
      %11 = sbr.rel target = $region3
    $region8: #{_lambda_.1} parent=1 // loop_exit
      _

</llo_original>
